<compile_context>
chip_gen: v7x
topology: tpu7x:2x2x1
jax: 0.10.0
libtpu: 0.0.40
codegen_flags: <defaults>
</compile_context>

<pallas_src>
import jax
import jax.numpy as jnp
from jax.experimental import pallas as pl
from jax.experimental.pallas import tpu as pltpu


def _token_size(kernel_size, output_dim):
    dims = [output_dim // 2 ** i for i in range(1, len(kernel_size))]
    dims.append(output_dim // 2 ** (len(kernel_size) - 1))
    return dims


def _padding_size(k, s):
    # faithful to the PyTorch code (including the `== True` quirk)
    if (k - s) % 2 == True:  # noqa: E712
        return (k - s) // 2
    return (k - s + 1) // 2


def _im2col_T(x_nhwc, k, s, p, OH, OW):
    """Transposed im2col -> (k*k*Cin, N*OH*OW); row order = (kh, kw, ci)."""
    N, H, W, C = x_nhwc.shape
    xp = jnp.pad(x_nhwc, ((0, 0), (p, p), (p, p), (0, 0)))
    cols = []
    for kh in range(k):
        for kw in range(k):
            sl = xp[:, kh:kh + OH * s:s, kw:kw + OW * s:s, :]        # (N,OH,OW,C)
            cols.append(jnp.transpose(sl, (3, 0, 1, 2)).reshape(C, -1))  # (C, M)
    return jnp.concatenate(cols, axis=0)                              # (k*k*C, M)


def _pick_tile(M, target=512):
    """Largest multiple-of-128 divisor of M that is <= target (fallback: M)."""
    best = None
    cand = 128
    while cand <= min(M, target):
        if M % cand == 0:
            best = cand
        cand += 128
    return best if best is not None else M


def _fused_conv_kernel(at_ref, wt_ref, b_ref, out_ref):
    """One block-diagonal matmul for all convs: (cout,K)@(K,tm) + bias."""
    acc = jnp.dot(wt_ref[...], at_ref[...], preferred_element_type=jnp.float32)
    out_ref[...] = (acc + b_ref[...]).astype(out_ref.dtype)  # single dense store


def cross_scale_embedding_forward(x_nchw, params, kernel_size=(2, 4), stride=2,
                                  compute_dtype=jnp.bfloat16, tile_target=512):
    """x_nchw: (N, Cin, H, W) float32 (PyTorch layout). Returns NCHW output."""
    N, Cin, H, W = x_nchw.shape
    OH, OW = H // stride, W // stride
    M = N * OH * OW

    # Match each (weight, bias) to its kernel size from the weight shape itself,
    # and order by kernel size (== PyTorch ModuleList / channel-concat order).
    params_sorted = sorted(params, key=lambda wb: int(wb[0].shape[-1]))
    ks = [int(w.shape[-1]) for (w, _) in params_sorted]
    assert ks == sorted(int(k) for k in kernel_size), (ks, list(kernel_size))

    x = jnp.transpose(x_nchw, (0, 2, 3, 1)).astype(compute_dtype)  # NHWC, bf16

    at_blocks, wt_blocks, biases, k_dims, c_dims = [], [], [], [], []
    for k, (w, b) in zip(ks, params_sorted):
        p = _padding_size(k, stride)
        assert (H + 2 * p - k) // stride + 1 == OH
        assert (W + 2 * p - k) // stride + 1 == OW
        at_blocks.append(_im2col_T(x, k, stride, p, OH, OW))        # (k*k*Cin, M)
        # (Cout,Cin,kh,kw) -> (Cout, kh, kw, Cin) -> (Cout, k*k*Cin): matches
        # the (kh, kw, ci) row order produced by _im2col_T.
        wt_blocks.append(jnp.transpose(w, (0, 2, 3, 1))
                         .reshape(w.shape[0], -1).astype(compute_dtype))
        biases.append(b.astype(jnp.float32))
        k_dims.append(k * k * Cin)
        c_dims.append(int(w.shape[0]))

    AT = jnp.concatenate(at_blocks, axis=0)                          # (K, M) bf16
    WT = jax.scipy.linalg.block_diag(*wt_blocks).astype(compute_dtype)  # (cout, K)
    bias = jnp.concatenate(biases).reshape(-1, 1)                    # (cout, 1) f32
    K = int(AT.shape[0])
    cout = int(WT.shape[0])

    tm = _pick_tile(M, tile_target)
    grid = (M // tm,)

    # Advisory cost for XLA scheduling around the kernel (useful flops only).
    flops = 2 * M * sum(kd * cd for kd, cd in zip(k_dims, c_dims))
    elt = jnp.dtype(compute_dtype).itemsize
    bytes_accessed = K * M * elt + cout * K * elt + cout * 4 + M * cout * 4
    cost = pl.CostEstimate(flops=flops, transcendentals=0,
                           bytes_accessed=bytes_accessed)

    # VMEM budget: double-buffered activation + output blocks + resident weights,
    # with headroom; clamped to 32 MiB so it is safe on v7x (64 MiB physical).
    per_step = 2 * (K * tm * elt + cout * tm * 4)
    resident = cout * K * elt + cout * 4
    vmem_limit = int(min(max(2 * (per_step + resident), 8 * 1024 * 1024),
                         32 * 1024 * 1024))

    out_t = pl.pallas_call(
        _fused_conv_kernel,
        out_shape=jax.ShapeDtypeStruct((cout, M), jnp.float32),
        grid_spec=pl.GridSpec(
            grid=grid,
            in_specs=[
                pl.BlockSpec((K, tm), lambda i: (0, i)),       # streamed activations
                pl.BlockSpec((cout, K), lambda i: (0, 0)),     # weights, VMEM-resident
                pl.BlockSpec((cout, 1), lambda i: (0, 0)),     # bias, VMEM-resident
            ],
            out_specs=pl.BlockSpec((cout, tm), lambda i: (0, i)),
        ),
        compiler_params=pltpu.CompilerParams(
            dimension_semantics=("parallel",),
            vmem_limit_bytes=vmem_limit),
        cost_estimate=cost,
    )(AT, WT, bias)

    out = out_t.reshape(cout, N, OH, OW)          # (cout, N, OH, OW)
    return jnp.transpose(out, (1, 0, 2, 3))       # NCHW


if __name__ == "__main__":
    def run_case(N, Cin, H, W, output_dim, kernel_size, stride, seed):
        tok = _token_size(sorted(kernel_size), output_dim)
        key = jax.random.PRNGKey(seed)
        keys = jax.random.split(key, 1 + 2 * len(kernel_size))
        x = jax.random.normal(keys[0], (N, Cin, H, W), jnp.float32)
        params = []
        for i, k in enumerate(sorted(kernel_size)):
            w = jax.random.normal(keys[1 + 2 * i], (tok[i], Cin, k, k),
                                  jnp.float32) * 0.1
            b = jax.random.normal(keys[2 + 2 * i], (tok[i],), jnp.float32) * 0.1
            params.append((w, b))

        out = cross_scale_embedding_forward(x, params, kernel_size, stride)
        out = jax.block_until_ready(out)

        # Reference: XLA conv with the same bf16 input precision + fp32 accum
        # (same semantics as torch Conv2d in NCHW/OIHW).
        def ref_conv(k, w, b):
            p = _padding_size(k, stride)
            y = jax.lax.conv_general_dilated(
                x.astype(jnp.bfloat16), w.astype(jnp.bfloat16),
                window_strides=(stride, stride), padding=[(p, p), (p, p)],
                dimension_numbers=("NCHW", "OIHW", "NCHW"),
                preferred_element_type=jnp.float32)
            return y + b[None, :, None, None].astype(jnp.float32)

        ref = jnp.concatenate(
            [ref_conv(k, w, b) for k, (w, b) in zip(sorted(kernel_size), params)],
            axis=1)
        assert out.shape == (N, output_dim, H // stride, W // stride), out.shape
        err = float(jnp.max(jnp.abs(out - ref)))
        assert jnp.allclose(out, ref, atol=2e-3, rtol=2e-3), err

    # Case 1: module-default small shape -> single grid step.
    run_case(N=2, Cin=4, H=16, W=16, output_dim=32,
             kernel_size=[2, 4], stride=2, seed=0)
    # Case 2: larger spatial, unsorted kernel_size list -> tiled grid of 4 steps,
    # exercises the param-ordering fix and pipelined activation streaming.
    run_case(N=2, Cin=3, H=64, W=64, output_dim=64,
             kernel_size=[4, 2], stride=2, seed=1)

    print("KERNEL_OK")
</pallas_src>

<mosaic_0001>
module attributes {stable_mosaic.version = 11 : i64} {
  func.func @_fused_conv_kernel(%arg0: i32, %arg1: memref<80x128xbf16, #tpu.memory_space<vmem>>, %arg2: memref<32x80xbf16, #tpu.memory_space<vmem>>, %arg3: memref<32x1xf32, #tpu.memory_space<vmem>>, %arg4: memref<32x128xf32, #tpu.memory_space<vmem>>) attributes {dimension_semantics = [#tpu.dimension_semantics<parallel>], iteration_bounds = array<i64: 1>, scalar_prefetch = 0 : i64, scratch_operands = 0 : i64, tpu.core_type = #tpu.core_type<tc>, window_params = [{transform_indices = @transform_0, window_bounds = array<i64: 80, 128>}, {pipeline_mode = #tpu.pipeline_mode<synchronous>, transform_indices = @transform_1, window_bounds = array<i64: 32, 80>}, {pipeline_mode = #tpu.pipeline_mode<synchronous>, transform_indices = @transform_2, window_bounds = array<i64: 32, 1>}, {transform_indices = @transform_3, window_bounds = array<i64: 32, 128>}]} {
    %c0 = arith.constant 0 : index
    %c0_0 = arith.constant 0 : index
    %0 = vector.load %arg2[%c0, %c0_0] : memref<32x80xbf16, #tpu.memory_space<vmem>>, vector<32x80xbf16>
    %c0_1 = arith.constant 0 : index
    %c0_2 = arith.constant 0 : index
    %1 = vector.load %arg1[%c0_1, %c0_2] : memref<80x128xbf16, #tpu.memory_space<vmem>>, vector<80x128xbf16>
    %cst = arith.constant dense<0.000000e+00> : vector<32x128xf32>
    %2 = tpu.matmul %0, %1, %cst {dimension_numbers = #tpu.dot_dimension_numbers<[1], [0], [0], [1], [0, 0, 1, 1], [], []>} : vector<32x80xbf16>, vector<80x128xbf16>, vector<32x128xf32> -> vector<32x128xf32>
    %c0_3 = arith.constant 0 : index
    %c0_4 = arith.constant 0 : index
    %3 = vector.load %arg3[%c0_3, %c0_4] : memref<32x1xf32, #tpu.memory_space<vmem>>, vector<32x1xf32>
    %4 = vector.broadcast %3 : vector<32x1xf32> to vector<32x128xf32>
    %5 = arith.addf %2, %4 : vector<32x128xf32>
    %c0_5 = arith.constant 0 : index
    %c0_6 = arith.constant 0 : index
    %6 = vector.load %arg4[%c0_5, %c0_6] : memref<32x128xf32, #tpu.memory_space<vmem>>, vector<32x128xf32>
    tpu.vector_store %arg4[%c0_5, %c0_6], %5 {strides = array<i32>} : memref<32x128xf32, #tpu.memory_space<vmem>>, vector<32x128xf32>,
    return
  }
  func.func @transform_0(%arg0: i32) -> (i32, i32) {
    %c0_i32 = arith.constant 0 : i32
    %c0_i32_0 = arith.constant 0 : i32
    return %c0_i32, %arg0 : i32, i32
  }
  func.func @transform_1(%arg0: i32) -> (i32, i32) {
    %c0_i32 = arith.constant 0 : i32
    %c0_i32_0 = arith.constant 0 : i32
    %c0_i32_1 = arith.constant 0 : i32
    return %c0_i32, %c0_i32_0 : i32, i32
  }
  func.func @transform_2(%arg0: i32) -> (i32, i32) {
    %c0_i32 = arith.constant 0 : i32
    %c0_i32_0 = arith.constant 0 : i32
    %c0_i32_1 = arith.constant 0 : i32
    return %c0_i32, %c0_i32_0 : i32, i32
  }
  func.func @transform_3(%arg0: i32) -> (i32, i32) {
    %c0_i32 = arith.constant 0 : i32
    %c0_i32_0 = arith.constant 0 : i32
    return %c0_i32, %arg0 : i32, i32
  }
}

</mosaic_0001>

<llo_original>
// kernel: tpu_custom_call.1
$region0: #{tpu_custom_call.1}
  #allocation0 [shape = 'u32[]', space=smem, size = 0x4, offset = 0x4, fixed_abs, tag = 'smem constant byte address 0x4 - core index']
  #allocation1 [shape = 'u32[144,128]{1,0:T(1,128)}', space=vmem, size = 0x12000, scoped, tag = 'internal scratch']
  %s0 = inlined_call_operand.hbm [shape: bf16[80,128], index: 0, kind: input, shape index: {}]
  %s1 = inlined_call_operand.vmem [shape: bf16[32,80], index: 1, kind: input, shape index: {}]
  %s2 = inlined_call_operand.vmem [shape: f32[32,1], index: 2, kind: input, shape index: {}]
  %s3 = inlined_call_operand.hbm [shape: f32[32,128], index: 3, kind: output, shape index: {}]
  %s4 = sld [smem:[#allocation0]]
  $region26: #{tpu_custom_call.1} parent=0
    _
  %s6 = ssub.s32 1, %s4
  %s7 = scalar_select 0, %s6, %s4
  $region1: #{tpu_custom_call.1} parent=0
    #allocation2 [shape = 'u8[20480]{0}', space=vmem, size = 0x5000, scoped, tag = 'input window, operand 0, single buffered']
    #allocation3 [shape = 's32[1]{0}', space=sflag, size = 0x4, scoped, tag = 'scoped memory for tpu_custom_call.1']
    #allocation4 [shape = 's32[1]{0}', space=sflag, size = 0x4, scoped, tag = 'scoped memory for tpu_custom_call.1']
    #allocation5 [shape = 'u8[16384]{0}', space=vmem, size = 0x4000, scoped, tag = 'output window, operand 0, single buffered']
    %8 = vsyncpa [#allocation3], 0
    %9 = vsyncpa [#allocation4], 0
    // Predicated region
    $region2: #{tpu_custom_call.1} parent=1 // pred_check
      _
    $region3: #{tpu_custom_call.1} parent=1 // pred_check_branch
      %11 = sbr.rel (0) target = $region5
    $region4: #{tpu_custom_call.1} parent=1 // pred_region
      %s13 = ssub.s32 640, 640
      %14 = vsyncadd [#allocation3], %s13
      %s15 = sshll.u32 [#allocation2], 4
      %s16 = int_to_ptr.vmem [resolvable:$true] %s15
      %21 = dma.hbm_to_vmem [thread:$0]  %s0, 640, %s16, [#allocation3], 64, 64, 4
    $region5: #{tpu_custom_call.1} parent=1 // pred_fallthru
      _
    // Predicated region
    $region6: #{tpu_custom_call.1} parent=1 // pred_check
      _
    $region7: #{tpu_custom_call.1} parent=1 // pred_check_branch
      %23 = sbr.rel (0) target = $region9
    $region8: #{tpu_custom_call.1} parent=1 // pred_region
      _
    $region9: #{tpu_custom_call.1} parent=1 // pred_fallthru
      _
    // Predicated region
    $region10: #{tpu_custom_call.1} parent=1 // pred_check
      _
    $region11: #{tpu_custom_call.1} parent=1 // pred_check_branch
      %25 = sbr.rel (0) target = $region13
    $region12: #{tpu_custom_call.1} parent=1 // pred_region
      _
    $region13: #{tpu_custom_call.1} parent=1 // pred_fallthru
      _
    // Predicated region
    $region14: #{tpu_custom_call.1} parent=1 // pred_check
      _
    $region15: #{tpu_custom_call.1} parent=1 // pred_check_branch
      %27 = sbr.rel (0) target = $region17
    $region16: #{tpu_custom_call.1} parent=1 // pred_region
      %28 = dma.done [#allocation3], 640
    $region17: #{tpu_custom_call.1} parent=1 // pred_fallthru
      _
    %v30 = vld [vmem:[%s1] sm:$0xf]
    %v31 = vld [vmem:[%s1 + $0x4] sm:$0xf]
    %v32 = vld [vmem:[%s1 + $0x8] sm:$0xf]
    %v33 = vld [vmem:[%s1 + $0xc] sm:$0xf]
    %v34 = vld [vmem:[#allocation2] sm:$0xf]
    %v35 = vld [vmem:[#allocation2 + $0x4] sm:$0xf]
    %v36 = vld [vmem:[#allocation2 + $0x8] sm:$0xf]
    %v37 = vld [vmem:[#allocation2 + $0xc] sm:$0xf]
    %v38 = vld [vmem:[#allocation2 + $0x10] sm:$0xf]
    %v39 = vld [vmem:[#allocation2 + $0x14] sm:$0xf]
    %v40 = vld [vmem:[#allocation2 + $0x18] sm:$0xf]
    %v41 = vld [vmem:[#allocation2 + $0x1c] sm:$0xf]
    %v42 = vld [vmem:[#allocation2 + $0x20] sm:$0xf]
    %v43 = vld [vmem:[#allocation2 + $0x24] sm:$0xf]
    %v44 = vld [vmem:[%s2] sm:$0xff]
    %v45 = vld [vmem:[%s2 + $0x8] sm:$0xff]
    %v46 = vld [vmem:[%s2 + $0x10] sm:$0xff]
    %v47 = vld [vmem:[%s2 + $0x18] sm:$0xff]
    %49 = vset.pattern.permute.xlu0 0
    %50 = vperm.xlu0 %49, %v44
    %v51 = vpop.permute.xlu0 %50
    %54 = vset.pattern.permute.xlu0 0
    %55 = vperm.xlu0 %54, %v45
    %v56 = vpop.permute.xlu0 %55
    %59 = vset.pattern.permute.xlu0 0
    %60 = vperm.xlu0 %59, %v46
    %v61 = vpop.permute.xlu0 %60
    %64 = vset.pattern.permute.xlu0 0
    %65 = vperm.xlu0 %64, %v47
    %v66 = vpop.permute.xlu0 %65
    %v72 = vunpack.c.l.b16 %v30
    %v73 = vunpack.c.l.b16 %v31
    %v74 = vunpack.c.l.b16 %v32
    %v75 = vunpack.c.l.b16 %v33
    %v76 = vpack.c.b16 %v73, %v72
    %v77 = vpack.c.b16 %v75, %v74
    %v88 = vunpack.c.l.b16 %v34
    %v89 = vunpack.c.l.b16 %v35
    %v90 = vunpack.c.l.b16 %v36
    %v91 = vunpack.c.l.b16 %v37
    %v92 = vunpack.c.l.b16 %v38
    %v93 = vunpack.c.l.b16 %v39
    %v94 = vunpack.c.l.b16 %v40
    %v95 = vunpack.c.l.b16 %v41
    %v96 = vunpack.c.l.b16 %v42
    %v97 = vunpack.c.l.b16 %v43
    %v98 = vpack.c.b16 %v89, %v88
    %v99 = vpack.c.b16 %v91, %v90
    %v100 = vpack.c.b16 %v93, %v92
    %v101 = vpack.c.b16 %v95, %v94
    %v102 = vpack.c.b16 %v97, %v96
    %vm108 = vcmask 654336
    %v110 = vsel %vm108, %v76, 0
    %v113 = vsel %vm108, %v77, 0
    %115 = vmatprep.subr.bf16.mxu0 0
    %116 = vmatpush1.bf16.msra.mxu0 %v98
    %117 = vmatprep.subr.bf16.mxu0 0
    %118 = vmatpush1.bf16.msra.mxu0 %v99
    %119 = vmatprep.subr.bf16.mxu0 0
    %120 = vmatpush1.bf16.msra.mxu0 %v100
    %121 = vmatprep.subr.bf16.mxu0 0
    %122 = vmatpush1.bf16.msra.mxu0 %v101
    %123 = vmatprep.subr.bf16.mxu0 0
    %124 = vmatpush1.bf16.msra.mxu0 %v102
    %125 = vmatprep.subr.bf16.mxu0 0
    %126 = vmatpush1.bf16.msra.mxu0 0
    %127 = vmatprep.subr.bf16.mxu0 0
    %128 = vmatpush1.bf16.msra.mxu0 0
    %129 = vmatprep.subr.bf16.mxu0 0
    %130 = vmatpush1.bf16.msra.mxu0 0
    %131 = vmatprep.subr.bf16.mxu0 0
    %132 = vmatpush1.bf16.msra.mxu0 0
    %133 = vmatprep.subr.bf16.mxu0 0
    %134 = vmatpush1.bf16.msra.mxu0 0
    %135 = vmatprep.subr.bf16.mxu0 0
    %136 = vmatpush1.bf16.msra.mxu0 0
    %137 = vmatprep.subr.bf16.mxu0 0
    %138 = vmatpush1.bf16.msra.mxu0 0
    %139 = vmatprep.subr.bf16.mxu0 0
    %140 = vmatpush1.bf16.msra.mxu0 0
    %141 = vmatprep.subr.bf16.mxu0 0
    %142 = vmatpush1.bf16.msra.mxu0 0
    %143 = vmatprep.subr.bf16.mxu0 0
    %144 = vmatpush1.bf16.msra.mxu0 0
    %145 = vmatprep.subr.bf16.mxu0 0
    %146 = vmatpush1.bf16.msra.mxu0 0
    %147 = vmatprep.mubr.bf16.mxu0 0
    %148 = vmatmul.mubr.bf16.gmra.mrb[0].mxu0 %v110
    %v149 = vpop.f32.mrb[0].mxu0
    %v150 = vadd.f32 %v51, %v149
    %v151 = vpop.f32.mrb[0].mxu0
    %v152 = vpop.f32.mrb[0].mxu0
    %v153 = vadd.f32 %v56, %v152
    %v154 = vpop.f32.mrb[0].mxu0
    %155 = vmatprep.mubr.bf16.mxu0 0
    %156 = vmatmul.mubr.bf16.gmra.mrb[0].mxu0 %v113
    %v157 = vpop.f32.mrb[0].mxu0
    %v158 = vadd.f32 %v61, %v157
    %v159 = vpop.f32.mrb[0].mxu0
    %v160 = vpop.f32.mrb[0].mxu0
    %v161 = vadd.f32 %v66, %v160
    %v162 = vpop.f32.mrb[0].mxu0
    %163 = vdwg.mxu0
    %164 = vst [vmem:[#allocation5] sm:$0xff] %v150
    %165 = vst [vmem:[#allocation5 + $0x8] sm:$0xff] %v153
    %166 = vst [vmem:[#allocation5 + $0x10] sm:$0xff] %v158
    %167 = vst [vmem:[#allocation5 + $0x18] sm:$0xff] %v161
    // Predicated region
    $region18: #{tpu_custom_call.1} parent=1 // pred_check
      _
    $region19: #{tpu_custom_call.1} parent=1 // pred_check_branch
      %169 = sbr.rel (0) target = $region21
    $region20: #{tpu_custom_call.1} parent=1 // pred_region
      %s171 = ssub.s32 512, 512
      %172 = vsyncadd [#allocation4], %s171
      %s173 = sshll.u32 [#allocation5], 4
      %s174 = int_to_ptr.vmem [resolvable:$true] %s173
      %179 = dma.vmem_to_hbm [thread:$0]  %s174, 512, %s3, [#allocation4], 128, 128, 8
    $region21: #{tpu_custom_call.1} parent=1 // pred_fallthru
      _
    // Predicated region
    $region22: #{tpu_custom_call.1} parent=1 // pred_check
      _
    $region23: #{tpu_custom_call.1} parent=1 // pred_check_branch
      %181 = sbr.rel (0) target = $region25
    $region24: #{tpu_custom_call.1} parent=1 // pred_region
      %182 = dma.done [#allocation4], 512
    $region25: #{tpu_custom_call.1} parent=1 // pred_fallthru
      _
    %183 = vsyncpa [#allocation3], 1
    %184 = vsyncpa [#allocation4], 1

</llo_original>
